<compile_context>
chip_gen: v7x
topology: tpu7x:2x2x1
jax: 0.10.0
libtpu: 0.0.40
codegen_flags: <defaults>
</compile_context>

<pallas_src>
import jax
import jax.numpy as jnp
from jax.experimental import pallas as pl
from jax.experimental.pallas import tpu as pltpu


def _remove_partial_mean_kernel(x_ref, node_ref, com_ref, rep_ref, pool_ref,
                                out_ref):
    """Masked-mean removal for one batch tile.

    Refs (TB = batch tile, ND = N*D):
      x_ref:    (TB, ND)  positions, node-major / dim-minor (row-major flatten)
      node_ref: (TB, N)   node mask (any dtype, cast to f32 here)
      com_ref:  (TB, N)   center-of-mass mask
      rep_ref:  (N, ND)   R[n, n*D+d] = 1   (broadcast per-node mask over D)
      pool_ref: (ND, ND)  P[k, l] = 1 if k%D == l%D  (per-dim sum + re-broadcast)
      out_ref:  (TB, ND)  centered positions
    """
    x = x_ref[...].astype(jnp.float32)            # (TB, ND)
    nm = node_ref[...].astype(jnp.float32)        # (TB, N)
    cm = com_ref[...].astype(jnp.float32)         # (TB, N)
    R = rep_ref[...]                              # (N, ND)
    P = pool_ref[...]                             # (ND, ND)

    # Expand the per-node masks over the D coordinates (lane-dense MXU matmul).
    cm_rep = jnp.dot(cm, R, preferred_element_type=jnp.float32)   # (TB, ND)
    nm_rep = jnp.dot(nm, R, preferred_element_type=jnp.float32)   # (TB, ND)

    # Per-dimension masked sum over nodes, already broadcast back to every
    # node slot:  masked_sum[b, n*D+d] = sum_m x[b, m*D+d] * cm[b, m].
    masked_sum = jnp.dot(x * cm_rep, P,
                         preferred_element_type=jnp.float32)      # (TB, ND)

    denom = jnp.sum(cm, axis=1, keepdims=True)                    # (TB, 1)
    # approx reciprocal -> EUP slot (free); clamp guards garbage rows of a
    # partial final block (valid rows always have denom >= 1).
    inv = pl.reciprocal(jnp.maximum(denom, 1e-12), approx=True)
    mean_rep = masked_sum * inv                                   # (TB, ND)

    out_ref[...] = (x - mean_rep * nm_rep).astype(out_ref.dtype)  # (TB, ND)


def _default_batch_tile(B, N, D, itemsize):
    """Batch tile on the sublane axis.

    Small totals (< ~1 MiB) or tiny batches: one grid step (pipeline overhead
    ~0.35us/step would dominate).  Larger totals: >= 2 grid steps (megacore
    on v7x) with ~0.5 MiB position blocks so DMA of step i+1 / writeback of
    step i-1 overlap compute.  Non-full tiles must be multiples of 8.
    """
    row_bytes = N * D * itemsize
    total = B * row_bytes
    if B <= 8 or total <= (1 << 20):
        return B
    tb = min(B // 2, max(8, (512 * 1024) // max(row_bytes, 1)))
    tb = max(8, (tb // 8) * 8)
    return tb


def ddpm_forward_preprocess(x, node_mask, anchors, fragment_mask,
                            center_of_mass='fragments', anchors_context=True,
                            inpainting=False, batch_tile=None):
    """Pallas implementation of the DDPM.forward preprocessing path.

    Args:
      x:             (B, N, D) float32 positions
      node_mask:     (B, N, 1) {0,1}  (f32 / bf16 / int8 all accepted)
      anchors:       (B, N, 1) {0,1}
      fragment_mask: (B, N, 1) {0,1}

    Returns:
      x_centered: (B, N, D) positions with the partial (masked) mean removed
      context:    (B, N, 2) concat([anchors, fragment_mask], -1)  (or (B,N,1))
    """
    B, N, D = x.shape
    ND = N * D

    # Center-of-mass mask selection, exactly as the torch module.
    if inpainting:
        com_mask = node_mask
    elif center_of_mass == 'fragments':
        com_mask = fragment_mask
    elif center_of_mass == 'anchors':
        com_mask = anchors
    else:
        raise NotImplementedError(center_of_mass)

    # NOTE: context is time-invariant across the denoising loop -- callers
    # should build it ONCE outside the loop and reuse it.  It is pure data
    # movement, so it stays out of the kernel.
    if anchors_context:
        context = jnp.concatenate([anchors, fragment_mask], axis=-1)
    else:
        context = fragment_mask

    # Free (bitcast) reshapes -- no transposes, no extra HBM round trips.
    x_flat = x.reshape(B, ND)
    node_flat = node_mask.reshape(B, N)
    com_flat = com_mask.reshape(B, N)

    # Tiny grid-invariant constants (DMA'd into VMEM once):
    #   R broadcasts a per-node mask over its D coordinates,
    #   P pools per-dimension over nodes and re-broadcasts the result.
    R = jnp.repeat(jnp.eye(N, dtype=jnp.float32), D, axis=1)      # (N, ND)
    P = jnp.tile(jnp.eye(D, dtype=jnp.float32), (N, N))           # (ND, ND)

    tb = batch_tile if batch_tile is not None else _default_batch_tile(
        B, N, D, x.dtype.itemsize)
    grid = (pl.cdiv(B, tb),)

    x_spec = pl.BlockSpec((tb, ND), lambda b: (b, 0))
    mask_spec = pl.BlockSpec((tb, N), lambda b: (b, 0))
    r_spec = pl.BlockSpec((N, ND), lambda b: (0, 0))
    p_spec = pl.BlockSpec((ND, ND), lambda b: (0, 0))

    out_flat = pl.pallas_call(
        _remove_partial_mean_kernel,
        out_shape=jax.ShapeDtypeStruct((B, ND), x.dtype),
        grid_spec=pltpu.PrefetchScalarGridSpec(
            num_scalar_prefetch=0,
            grid=grid,
            in_specs=[x_spec, mask_spec, mask_spec, r_spec, p_spec],
            out_specs=x_spec,
        ),
        compiler_params=pltpu.CompilerParams(
            dimension_semantics=("parallel",)),
    )(x_flat, node_flat, com_flat, R, P)

    x_centered = out_flat.reshape(B, N, D)   # free reshape back

    # TODO(synk): self.edm.forward(x, h, ...) -- the EDM / Dynamics (EGNN)
    # classes are not included in the provided source, so the diffusion loss
    # path cannot be translated faithfully here.
    return x_centered, context


def _reference(x, node_mask, anchors, fragment_mask):
    """Pure-JAX reference matching utils.remove_partial_mean_with_mask."""
    com_mask = fragment_mask
    mean = jnp.sum(x * com_mask, axis=1, keepdims=True) / jnp.sum(
        com_mask, axis=1, keepdims=True)
    x_centered = x - mean * node_mask
    context = jnp.concatenate([anchors, fragment_mask], axis=-1)
    return x_centered, context


def _make_inputs(key, B, N, D, in_node_nf=5):
    k_x, k_fm, k_an, k_h = jax.random.split(key, 4)
    x = jax.random.normal(k_x, (B, N, D), dtype=jnp.float32)
    node_mask = jnp.ones((B, N, 1), dtype=jnp.float32)
    frag_bits = (jax.random.uniform(k_fm, (B, N, 1)) > 0.5).astype(jnp.float32)
    frag_bits = frag_bits.at[:, :2, :].set(1.0)      # ensure nonzero denom
    fragment_mask = frag_bits * node_mask
    anchors = (jax.random.uniform(k_an, (B, N, 1)) > 0.7).astype(jnp.float32)
    anchors = anchors * fragment_mask                # anchors are fragment atoms
    one_hot = jax.random.normal(k_h, (B, N, in_node_nf), dtype=jnp.float32)
    linker_mask = node_mask * (1.0 - fragment_mask)
    return {
        'positions': x,
        'one_hot': one_hot,
        'atom_mask': node_mask,
        'edge_mask': jnp.ones((B * N * N, 1), dtype=jnp.float32),
        'anchors': anchors,
        'fragment_mask': fragment_mask,
        'linker_mask': linker_mask,
    }


def _check(data, batch_tile=None):
    x_centered, context = ddpm_forward_preprocess(
        data['positions'], data['atom_mask'], data['anchors'],
        data['fragment_mask'], batch_tile=batch_tile)
    jax.block_until_ready((x_centered, context))

    x_ref, ctx_ref = _reference(data['positions'], data['atom_mask'],
                                data['anchors'], data['fragment_mask'])
    assert jnp.allclose(x_centered, x_ref, atol=1e-5), "position mismatch"
    assert jnp.allclose(context, ctx_ref), "context mismatch"

    # assert_partial_mean_zero_with_mask: masked mean should now be ~0
    residual_mean = jnp.sum(x_centered * data['fragment_mask'], axis=1) / \
        jnp.sum(data['fragment_mask'], axis=1)
    assert jnp.all(jnp.abs(residual_mean) < 1e-4), "partial mean not zero"


if __name__ == "__main__":
    key = jax.random.PRNGKey(0)
    k1, k2 = jax.random.split(key)

    # Small single-grid-step case (module-consistent shapes).
    B, N, D = 2, 8, 3            # batch, atoms, n_dims
    _check(_make_inputs(k1, B, N, D))

    # Multi-grid-step case: exercises the tiled / pipelined path (grid=(2,)).
    _check(_make_inputs(k2, 16, 8, 3), batch_tile=8)

    print("KERNEL_OK")
</pallas_src>

<mosaic_0001>
module attributes {stable_mosaic.version = 11 : i64} {
  func.func @_remove_partial_mean_kernel(%arg0: i32, %arg1: memref<2x24xf32, #tpu.memory_space<vmem>>, %arg2: memref<2x8xf32, #tpu.memory_space<vmem>>, %arg3: memref<2x8xf32, #tpu.memory_space<vmem>>, %arg4: memref<8x24xf32, #tpu.memory_space<vmem>>, %arg5: memref<24x24xf32, #tpu.memory_space<vmem>>, %arg6: memref<2x24xf32, #tpu.memory_space<vmem>>) attributes {dimension_semantics = [#tpu.dimension_semantics<parallel>], iteration_bounds = array<i64: 1>, scalar_prefetch = 0 : i64, scratch_operands = 0 : i64, tpu.core_type = #tpu.core_type<tc>, window_params = [{transform_indices = @transform_0, window_bounds = array<i64: 2, 24>}, {transform_indices = @transform_1, window_bounds = array<i64: 2, 8>}, {transform_indices = @transform_2, window_bounds = array<i64: 2, 8>}, {pipeline_mode = #tpu.pipeline_mode<synchronous>, transform_indices = @transform_3, window_bounds = array<i64: 8, 24>}, {pipeline_mode = #tpu.pipeline_mode<synchronous>, transform_indices = @transform_4, window_bounds = array<i64: 24, 24>}, {transform_indices = @transform_5, window_bounds = array<i64: 2, 24>}]} {
    %c0 = arith.constant 0 : index
    %c0_0 = arith.constant 0 : index
    %0 = vector.load %arg1[%c0, %c0_0] : memref<2x24xf32, #tpu.memory_space<vmem>>, vector<2x24xf32>
    %c0_1 = arith.constant 0 : index
    %c0_2 = arith.constant 0 : index
    %1 = vector.load %arg2[%c0_1, %c0_2] : memref<2x8xf32, #tpu.memory_space<vmem>>, vector<2x8xf32>
    %c0_3 = arith.constant 0 : index
    %c0_4 = arith.constant 0 : index
    %2 = vector.load %arg3[%c0_3, %c0_4] : memref<2x8xf32, #tpu.memory_space<vmem>>, vector<2x8xf32>
    %c0_5 = arith.constant 0 : index
    %c0_6 = arith.constant 0 : index
    %3 = vector.load %arg4[%c0_5, %c0_6] : memref<8x24xf32, #tpu.memory_space<vmem>>, vector<8x24xf32>
    %c0_7 = arith.constant 0 : index
    %c0_8 = arith.constant 0 : index
    %4 = vector.load %arg5[%c0_7, %c0_8] : memref<24x24xf32, #tpu.memory_space<vmem>>, vector<24x24xf32>
    %cst = arith.constant dense<0.000000e+00> : vector<2x24xf32>
    %5 = tpu.matmul %2, %3, %cst {dimension_numbers = #tpu.dot_dimension_numbers<[1], [0], [0], [1], [0, 0, 1, 1], [], []>} : vector<2x8xf32>, vector<8x24xf32>, vector<2x24xf32> -> vector<2x24xf32>
    %cst_9 = arith.constant dense<0.000000e+00> : vector<2x24xf32>
    %6 = tpu.matmul %1, %3, %cst_9 {dimension_numbers = #tpu.dot_dimension_numbers<[1], [0], [0], [1], [0, 0, 1, 1], [], []>} : vector<2x8xf32>, vector<8x24xf32>, vector<2x24xf32> -> vector<2x24xf32>
    %7 = arith.mulf %0, %5 : vector<2x24xf32>
    %cst_10 = arith.constant dense<0.000000e+00> : vector<2x24xf32>
    %8 = tpu.matmul %7, %4, %cst_10 {dimension_numbers = #tpu.dot_dimension_numbers<[1], [0], [0], [1], [0, 0, 1, 1], [], []>} : vector<2x24xf32>, vector<24x24xf32>, vector<2x24xf32> -> vector<2x24xf32>
    %cst_11 = arith.constant dense<0.000000e+00> : vector<2xf32>
    %9 = vector.multi_reduction <add>, %2, %cst_11 [1] : vector<2x8xf32> to vector<2xf32>
    %10 = vector.shape_cast %9 : vector<2xf32> to vector<2x1xf32>
    %cst_12 = arith.constant 9.99999996E-13 : f32
    %11 = vector.broadcast %cst_12 : f32 to vector<2x1xf32>
    %12 = arith.maximumf %10, %11 : vector<2x1xf32>
    %13 = tpu.reciprocal %12 {approx = true} : vector<2x1xf32> -> vector<2x1xf32>
    %14 = vector.broadcast %13 : vector<2x1xf32> to vector<2x24xf32>
    %15 = arith.mulf %8, %14 : vector<2x24xf32>
    %16 = arith.mulf %15, %6 : vector<2x24xf32>
    %17 = arith.subf %0, %16 : vector<2x24xf32>
    %c0_13 = arith.constant 0 : index
    %c0_14 = arith.constant 0 : index
    %18 = vector.load %arg6[%c0_13, %c0_14] : memref<2x24xf32, #tpu.memory_space<vmem>>, vector<2x24xf32>
    tpu.vector_store %arg6[%c0_13, %c0_14], %17 {strides = array<i32>} : memref<2x24xf32, #tpu.memory_space<vmem>>, vector<2x24xf32>,
    return
  }
  func.func @transform_0(%arg0: i32) -> (i32, i32) {
    %c0_i32 = arith.constant 0 : i32
    %c0_i32_0 = arith.constant 0 : i32
    return %arg0, %c0_i32 : i32, i32
  }
  func.func @transform_1(%arg0: i32) -> (i32, i32) {
    %c0_i32 = arith.constant 0 : i32
    %c0_i32_0 = arith.constant 0 : i32
    return %arg0, %c0_i32 : i32, i32
  }
  func.func @transform_2(%arg0: i32) -> (i32, i32) {
    %c0_i32 = arith.constant 0 : i32
    %c0_i32_0 = arith.constant 0 : i32
    return %arg0, %c0_i32 : i32, i32
  }
  func.func @transform_3(%arg0: i32) -> (i32, i32) {
    %c0_i32 = arith.constant 0 : i32
    %c0_i32_0 = arith.constant 0 : i32
    %c0_i32_1 = arith.constant 0 : i32
    return %c0_i32, %c0_i32_0 : i32, i32
  }
  func.func @transform_4(%arg0: i32) -> (i32, i32) {
    %c0_i32 = arith.constant 0 : i32
    %c0_i32_0 = arith.constant 0 : i32
    %c0_i32_1 = arith.constant 0 : i32
    return %c0_i32, %c0_i32_0 : i32, i32
  }
  func.func @transform_5(%arg0: i32) -> (i32, i32) {
    %c0_i32 = arith.constant 0 : i32
    %c0_i32_0 = arith.constant 0 : i32
    return %arg0, %c0_i32 : i32, i32
  }
}

</mosaic_0001>

<llo_original>
// kernel: tpu_custom_call.1
$region0: #{tpu_custom_call.1}
  #allocation0 [shape = 'u32[]', space=smem, size = 0x4, offset = 0x4, fixed_abs, tag = 'smem constant byte address 0x4 - core index']
  #allocation1 [shape = 'u32[144,128]{1,0:T(1,128)}', space=vmem, size = 0x12000, scoped, tag = 'internal scratch']
  %s0 = inlined_call_operand.hbm [shape: f32[2,24], index: 0, kind: input, shape index: {}]
  %s1 = inlined_call_operand.vmem [shape: f32[2,8], index: 1, kind: input, shape index: {}]
  %s2 = inlined_call_operand.hbm [shape: f32[2,8], index: 2, kind: input, shape index: {}]
  %s3 = inlined_call_operand.vmem [shape: f32[8,24], index: 3, kind: input, shape index: {}]
  %s4 = inlined_call_operand.hbm [shape: f32[24,24], index: 4, kind: input, shape index: {}]
  %s5 = inlined_call_operand.hbm [shape: f32[2,24], index: 5, kind: output, shape index: {}]
  %s6 = sld [smem:[#allocation0]]
  $region42: #{tpu_custom_call.1} parent=0
    _
  %s8 = ssub.s32 1, %s6
  %s9 = scalar_select 0, %s8, %s6
  $region1: #{tpu_custom_call.1} parent=0
    #allocation2 [shape = 'u8[1024]{0}', space=vmem, size = 0x400, scoped, tag = 'input window, operand 0, single buffered']
    #allocation3 [shape = 's32[1]{0}', space=sflag, size = 0x4, scoped, tag = 'scoped memory for tpu_custom_call.1']
    #allocation4 [shape = 's32[1]{0}', space=sflag, size = 0x4, scoped, tag = 'scoped memory for tpu_custom_call.1']
    #allocation5 [shape = 'u8[1024]{0}', space=vmem, size = 0x400, scoped, tag = 'input window, operand 2, single buffered']
    #allocation6 [shape = 's32[1]{0}', space=sflag, size = 0x4, scoped, tag = 'scoped memory for tpu_custom_call.1']
    #allocation7 [shape = 'u8[12288]{0}', space=vmem, size = 0x3000, scoped, tag = 'input window, operand 4, single buffered']
    #allocation8 [shape = 'u8[1024]{0}', space=vmem, size = 0x400, scoped, tag = 'output window, operand 0, single buffered']
    %10 = vsyncpa [#allocation3], 0
    %11 = vsyncpa [#allocation6], 0
    %12 = vsyncpa [#allocation4], 0
    // Predicated region
    $region2: #{tpu_custom_call.1} parent=1 // pred_check
      _
    $region3: #{tpu_custom_call.1} parent=1 // pred_check_branch
      %14 = sbr.rel (0) target = $region5
    $region4: #{tpu_custom_call.1} parent=1 // pred_region
      %s16 = ssub.s32 32, 32
      %17 = vsyncadd [#allocation3], %s16
      %s19 = sshll.u32 [#allocation2], 4
      %s20 = int_to_ptr.vmem [resolvable:$true] %s19
      %22 = dma.hbm_to_vmem [thread:$0]  %s0, 32, %s20, [#allocation3]
    $region5: #{tpu_custom_call.1} parent=1 // pred_fallthru
      _
    // Predicated region
    $region6: #{tpu_custom_call.1} parent=1 // pred_check
      _
    $region7: #{tpu_custom_call.1} parent=1 // pred_check_branch
      %24 = sbr.rel (0) target = $region9
    $region8: #{tpu_custom_call.1} parent=1 // pred_region
      _
    $region9: #{tpu_custom_call.1} parent=1 // pred_fallthru
      _
    // Predicated region
    $region10: #{tpu_custom_call.1} parent=1 // pred_check
      _
    $region11: #{tpu_custom_call.1} parent=1 // pred_check_branch
      %26 = sbr.rel (0) target = $region13
    $region12: #{tpu_custom_call.1} parent=1 // pred_region
      %s28 = ssub.s32 32, 32
      %29 = vsyncadd [#allocation6], %s28
      %s31 = sshll.u32 [#allocation5], 4
      %s32 = int_to_ptr.vmem [resolvable:$true] %s31
      %34 = dma.hbm_to_vmem [thread:$0]  %s2, 32, %s32, [#allocation6]
    $region13: #{tpu_custom_call.1} parent=1 // pred_fallthru
      _
    // Predicated region
    $region14: #{tpu_custom_call.1} parent=1 // pred_check
      _
    $region15: #{tpu_custom_call.1} parent=1 // pred_check_branch
      %36 = sbr.rel (0) target = $region17
    $region16: #{tpu_custom_call.1} parent=1 // pred_region
      _
    $region17: #{tpu_custom_call.1} parent=1 // pred_fallthru
      _
    // Predicated region
    $region18: #{tpu_custom_call.1} parent=1 // pred_check
      _
    $region19: #{tpu_custom_call.1} parent=1 // pred_check_branch
      %38 = sbr.rel (0) target = $region21
    $region20: #{tpu_custom_call.1} parent=1 // pred_region
      %s40 = ssub.s32 384, 384
      %41 = vsyncadd [#allocation6], %s40
      %s42 = sshll.u32 [#allocation7], 4
      %s43 = int_to_ptr.vmem [resolvable:$true] %s42
      %48 = dma.hbm_to_vmem [thread:$0]  %s4, 384, %s43, [#allocation6], 128, 128, 8
    $region21: #{tpu_custom_call.1} parent=1 // pred_fallthru
      _
    // Predicated region
    $region22: #{tpu_custom_call.1} parent=1 // pred_check
      _
    $region23: #{tpu_custom_call.1} parent=1 // pred_check_branch
      %50 = sbr.rel (0) target = $region25
    $region24: #{tpu_custom_call.1} parent=1 // pred_region
      %51 = dma.done [#allocation3], 32
    $region25: #{tpu_custom_call.1} parent=1 // pred_fallthru
      _
    // Predicated region
    $region26: #{tpu_custom_call.1} parent=1 // pred_check
      _
    $region27: #{tpu_custom_call.1} parent=1 // pred_check_branch
      %53 = sbr.rel (0) target = $region29
    $region28: #{tpu_custom_call.1} parent=1 // pred_region
      %54 = dma.done [#allocation6], 32
    $region29: #{tpu_custom_call.1} parent=1 // pred_fallthru
      _
    // Predicated region
    $region30: #{tpu_custom_call.1} parent=1 // pred_check
      _
    $region31: #{tpu_custom_call.1} parent=1 // pred_check_branch
      %56 = sbr.rel (0) target = $region33
    $region32: #{tpu_custom_call.1} parent=1 // pred_region
      %57 = dma.done [#allocation6], 384
    $region33: #{tpu_custom_call.1} parent=1 // pred_fallthru
      _
    %v58 = vld [vmem:[#allocation2] sm:$0x3]
    %v59 = vld [vmem:[%s1] sm:$0x3]
    %v60 = vld [vmem:[#allocation5] sm:$0x3]
    %v61 = vld [vmem:[%s3] sm:$0xff]
    %v62 = vld [vmem:[#allocation7] sm:$0xff]
    %v63 = vld [vmem:[#allocation7 + $0x8] sm:$0xff]
    %v64 = vld [vmem:[#allocation7 + $0x10] sm:$0xff]
    %vm65 = vcmask 64512
    %v67 = vsel %vm65, %v60, 0
    %69 = vmatprep.subr.mxu0 0.0
    %70 = vmatpush1.msra.mxu0 %v61
    %71 = vmatprep.subr.mxu0 0.0
    %72 = vmatpush1.msra.mxu0 0.0
    %73 = vmatprep.subr.mxu0 0.0
    %74 = vmatpush1.msra.mxu0 0.0
    %75 = vmatprep.subr.mxu0 0.0
    %76 = vmatpush1.msra.mxu0 0.0
    %77 = vmatprep.subr.mxu0 0.0
    %78 = vmatpush1.msra.mxu0 0.0
    %79 = vmatprep.subr.mxu0 0.0
    %80 = vmatpush1.msra.mxu0 0.0
    %81 = vmatprep.subr.mxu0 0.0
    %82 = vmatpush1.msra.mxu0 0.0
    %83 = vmatprep.subr.mxu0 0.0
    %84 = vmatpush1.msra.mxu0 0.0
    %85 = vmatprep.subr.mxu0 0.0
    %86 = vmatpush1.msra.mxu0 0.0
    %87 = vmatprep.subr.mxu0 0.0
    %88 = vmatpush1.msra.mxu0 0.0
    %89 = vmatprep.subr.mxu0 0.0
    %90 = vmatpush1.msra.mxu0 0.0
    %91 = vmatprep.subr.mxu0 0.0
    %92 = vmatpush1.msra.mxu0 0.0
    %93 = vmatprep.subr.mxu0 0.0
    %94 = vmatpush1.msra.mxu0 0.0
    %95 = vmatprep.subr.mxu0 0.0
    %96 = vmatpush1.msra.mxu0 0.0
    %97 = vmatprep.subr.mxu0 0.0
    %98 = vmatpush1.msra.mxu0 0.0
    %99 = vmatprep.subr.mxu0 0.0
    %100 = vmatpush1.msra.mxu0 0.0
    %101 = vmatprep.subr.mxu0 0.0
    %102 = vmatpush1.msra.mxu0 0.0
    %103 = vmatprep.subr.mxu0 0.0
    %104 = vmatpush1.msra.mxu0 0.0
    %105 = vmatprep.subr.mxu0 0.0
    %106 = vmatpush1.msra.mxu0 0.0
    %107 = vmatprep.subr.mxu0 0.0
    %108 = vmatpush1.msra.mxu0 0.0
    %109 = vmatprep.subr.mxu0 0.0
    %110 = vmatpush1.msra.mxu0 0.0
    %111 = vmatprep.subr.mxu0 0.0
    %112 = vmatpush1.msra.mxu0 0.0
    %113 = vmatprep.subr.mxu0 0.0
    %114 = vmatpush1.msra.mxu0 0.0
    %115 = vmatprep.subr.mxu0 0.0
    %116 = vmatpush1.msra.mxu0 0.0
    %117 = vmatprep.subr.mxu0 0.0
    %118 = vmatpush1.msra.mxu0 0.0
    %119 = vmatprep.subr.mxu0 0.0
    %120 = vmatpush1.msra.mxu0 0.0
    %121 = vmatprep.subr.mxu0 0.0
    %122 = vmatpush1.msra.mxu0 0.0
    %123 = vmatprep.subr.mxu0 0.0
    %124 = vmatpush1.msra.mxu0 0.0
    %125 = vmatprep.subr.mxu0 0.0
    %126 = vmatpush1.msra.mxu0 0.0
    %127 = vmatprep.subr.mxu0 0.0
    %128 = vmatpush1.msra.mxu0 0.0
    %129 = vmatprep.subr.mxu0 0.0
    %130 = vmatpush1.msra.mxu0 0.0
    %131 = vmatprep.subr.mxu0 0.0
    %132 = vmatpush1.msra.mxu0 0.0
    %133 = vmatprep.mubr.f32.mxu0 0.0
    %134 = vmatmul.mubr.f32.gmra.mrb[0].mxu0 %v67
    %v135 = vpop.f32.mrb[0].mxu0
    %v136 = vadd.f32 0.0, %v135
    %v137 = vpop.f32.mrb[0].mxu0
    %138 = vdwg.mxu0
    %v140 = vsel %vm65, %v59, 0
    %142 = vmatprep.subr.mxu0 0.0
    %143 = vmatpush1.msra.mxu0 %v61
    %144 = vmatprep.subr.mxu0 0.0
    %145 = vmatpush1.msra.mxu0 0.0
    %146 = vmatprep.subr.mxu0 0.0
    %147 = vmatpush1.msra.mxu0 0.0
    %148 = vmatprep.subr.mxu0 0.0
    %149 = vmatpush1.msra.mxu0 0.0
    %150 = vmatprep.subr.mxu0 0.0
    %151 = vmatpush1.msra.mxu0 0.0
    %152 = vmatprep.subr.mxu0 0.0
    %153 = vmatpush1.msra.mxu0 0.0
    %154 = vmatprep.subr.mxu0 0.0
    %155 = vmatpush1.msra.mxu0 0.0
    %156 = vmatprep.subr.mxu0 0.0
    %157 = vmatpush1.msra.mxu0 0.0
    %158 = vmatprep.subr.mxu0 0.0
    %159 = vmatpush1.msra.mxu0 0.0
    %160 = vmatprep.subr.mxu0 0.0
    %161 = vmatpush1.msra.mxu0 0.0
    %162 = vmatprep.subr.mxu0 0.0
    %163 = vmatpush1.msra.mxu0 0.0
    %164 = vmatprep.subr.mxu0 0.0
    %165 = vmatpush1.msra.mxu0 0.0
    %166 = vmatprep.subr.mxu0 0.0
    %167 = vmatpush1.msra.mxu0 0.0
    %168 = vmatprep.subr.mxu0 0.0
    %169 = vmatpush1.msra.mxu0 0.0
    %170 = vmatprep.subr.mxu0 0.0
    %171 = vmatpush1.msra.mxu0 0.0
    %172 = vmatprep.subr.mxu0 0.0
    %173 = vmatpush1.msra.mxu0 0.0
    %174 = vmatprep.subr.mxu0 0.0
    %175 = vmatpush1.msra.mxu0 0.0
    %176 = vmatprep.subr.mxu0 0.0
    %177 = vmatpush1.msra.mxu0 0.0
    %178 = vmatprep.subr.mxu0 0.0
    %179 = vmatpush1.msra.mxu0 0.0
    %180 = vmatprep.subr.mxu0 0.0
    %181 = vmatpush1.msra.mxu0 0.0
    %182 = vmatprep.subr.mxu0 0.0
    %183 = vmatpush1.msra.mxu0 0.0
    %184 = vmatprep.subr.mxu0 0.0
    %185 = vmatpush1.msra.mxu0 0.0
    %186 = vmatprep.subr.mxu0 0.0
    %187 = vmatpush1.msra.mxu0 0.0
    %188 = vmatprep.subr.mxu0 0.0
    %189 = vmatpush1.msra.mxu0 0.0
    %190 = vmatprep.subr.mxu0 0.0
    %191 = vmatpush1.msra.mxu0 0.0
    %192 = vmatprep.subr.mxu0 0.0
    %193 = vmatpush1.msra.mxu0 0.0
    %194 = vmatprep.subr.mxu0 0.0
    %195 = vmatpush1.msra.mxu0 0.0
    %196 = vmatprep.subr.mxu0 0.0
    %197 = vmatpush1.msra.mxu0 0.0
    %198 = vmatprep.subr.mxu0 0.0
    %199 = vmatpush1.msra.mxu0 0.0
    %200 = vmatprep.subr.mxu0 0.0
    %201 = vmatpush1.msra.mxu0 0.0
    %202 = vmatprep.subr.mxu0 0.0
    %203 = vmatpush1.msra.mxu0 0.0
    %204 = vmatprep.subr.mxu0 0.0
    %205 = vmatpush1.msra.mxu0 0.0
    %206 = vmatprep.mubr.f32.mxu0 0.0
    %207 = vmatmul.mubr.f32.gmra.mrb[0].mxu0 %v140
    %v208 = vpop.f32.mrb[0].mxu0
    %v209 = vadd.f32 0.0, %v208
    %v210 = vpop.f32.mrb[0].mxu0
    %211 = vdwg.mxu0
    %v212 = vmul.f32 %v58, %v136
    %vm213 = vcmask 195584
    %v215 = vsel %vm213, %v212, 0
    %217 = vmatprep.subr.mxu0 0.0
    %218 = vmatpush1.msra.mxu0 %v62
    %219 = vmatprep.subr.mxu0 0.0
    %220 = vmatpush1.msra.mxu0 %v63
    %221 = vmatprep.subr.mxu0 0.0
    %222 = vmatpush1.msra.mxu0 %v64
    %223 = vmatprep.subr.mxu0 0.0
    %224 = vmatpush1.msra.mxu0 0.0
    %225 = vmatprep.subr.mxu0 0.0
    %226 = vmatpush1.msra.mxu0 0.0
    %227 = vmatprep.subr.mxu0 0.0
    %228 = vmatpush1.msra.mxu0 0.0
    %229 = vmatprep.subr.mxu0 0.0
    %230 = vmatpush1.msra.mxu0 0.0
    %231 = vmatprep.subr.mxu0 0.0
    %232 = vmatpush1.msra.mxu0 0.0
    %233 = vmatprep.subr.mxu0 0.0
    %234 = vmatpush1.msra.mxu0 0.0
    %235 = vmatprep.subr.mxu0 0.0
    %236 = vmatpush1.msra.mxu0 0.0
    %237 = vmatprep.subr.mxu0 0.0
    %238 = vmatpush1.msra.mxu0 0.0
    %239 = vmatprep.subr.mxu0 0.0
    %240 = vmatpush1.msra.mxu0 0.0
    %241 = vmatprep.subr.mxu0 0.0
    %242 = vmatpush1.msra.mxu0 0.0
    %243 = vmatprep.subr.mxu0 0.0
    %244 = vmatpush1.msra.mxu0 0.0
    %245 = vmatprep.subr.mxu0 0.0
    %246 = vmatpush1.msra.mxu0 0.0
    %247 = vmatprep.subr.mxu0 0.0
    %248 = vmatpush1.msra.mxu0 0.0
    %249 = vmatprep.subr.mxu0 0.0
    %250 = vmatpush1.msra.mxu0 0.0
    %251 = vmatprep.subr.mxu0 0.0
    %252 = vmatpush1.msra.mxu0 0.0
    %253 = vmatprep.subr.mxu0 0.0
    %254 = vmatpush1.msra.mxu0 0.0
    %255 = vmatprep.subr.mxu0 0.0
    %256 = vmatpush1.msra.mxu0 0.0
    %257 = vmatprep.subr.mxu0 0.0
    %258 = vmatpush1.msra.mxu0 0.0
    %259 = vmatprep.subr.mxu0 0.0
    %260 = vmatpush1.msra.mxu0 0.0
    %261 = vmatprep.subr.mxu0 0.0
    %262 = vmatpush1.msra.mxu0 0.0
    %263 = vmatprep.subr.mxu0 0.0
    %264 = vmatpush1.msra.mxu0 0.0
    %265 = vmatprep.subr.mxu0 0.0
    %266 = vmatpush1.msra.mxu0 0.0
    %267 = vmatprep.subr.mxu0 0.0
    %268 = vmatpush1.msra.mxu0 0.0
    %269 = vmatprep.subr.mxu0 0.0
    %270 = vmatpush1.msra.mxu0 0.0
    %271 = vmatprep.subr.mxu0 0.0
    %272 = vmatpush1.msra.mxu0 0.0
    %273 = vmatprep.subr.mxu0 0.0
    %274 = vmatpush1.msra.mxu0 0.0
    %275 = vmatprep.subr.mxu0 0.0
    %276 = vmatpush1.msra.mxu0 0.0
    %277 = vmatprep.subr.mxu0 0.0
    %278 = vmatpush1.msra.mxu0 0.0
    %279 = vmatprep.subr.mxu0 0.0
    %280 = vmatpush1.msra.mxu0 0.0
    %281 = vmatprep.mubr.f32.mxu0 0.0
    %282 = vmatmul.mubr.f32.gmra.mrb[0].mxu0 %v215
    %v283 = vpop.f32.mrb[0].mxu0
    %v284 = vadd.f32 0.0, %v283
    %v285 = vpop.f32.mrb[0].mxu0
    %286 = vdwg.mxu0
    %vm287 = vcmask 58368
    %v288 = vsel %vm287, %v60, 0.0
    %289 = vadd.xlane.f32.xlu0 %v288
    %v290 = vpop.xlane.xlu0 %289
    %v291 = vmax.f32 %v290, 1e-12
    %v292 = vrcp.pop %v291
    %v293 = vmul.f32 %v284, %v292
    %v294 = vmul.f32 %v293, %v209
    %v295 = vsub.f32 %v58, %v294
    %vm296 = vcmask 189440
    %297 = vst.msk [vmem:[#allocation8] sm:$0x3] %vm296, %v295
    // Predicated region
    $region34: #{tpu_custom_call.1} parent=1 // pred_check
      _
    $region35: #{tpu_custom_call.1} parent=1 // pred_check_branch
      %299 = sbr.rel (0) target = $region37
    $region36: #{tpu_custom_call.1} parent=1 // pred_region
      %s301 = ssub.s32 32, 32
      %302 = vsyncadd [#allocation4], %s301
      %s304 = sshll.u32 [#allocation8], 4
      %s305 = int_to_ptr.vmem [resolvable:$true] %s304
      %307 = dma.vmem_to_hbm [thread:$0]  %s305, 32, %s5, [#allocation4]
    $region37: #{tpu_custom_call.1} parent=1 // pred_fallthru
      _
    // Predicated region
    $region38: #{tpu_custom_call.1} parent=1 // pred_check
      _
    $region39: #{tpu_custom_call.1} parent=1 // pred_check_branch
      %309 = sbr.rel (0) target = $region41
    $region40: #{tpu_custom_call.1} parent=1 // pred_region
      %310 = dma.done [#allocation4], 32
    $region41: #{tpu_custom_call.1} parent=1 // pred_fallthru
      _
    %311 = vsyncpa [#allocation3], 1
    %312 = vsyncpa [#allocation6], 1
    %313 = vsyncpa [#allocation4], 1

</llo_original>
